<compile_context>
chip_gen: v7x
topology: tpu7x:2x2x1
jax: 0.10.0
libtpu: 0.0.40
codegen_flags: <defaults>
</compile_context>

<pallas_src>
import functools

import jax
import jax.numpy as jnp
from jax.experimental import pallas as pl
from jax.experimental.pallas import tpu as pltpu


def _round8(n):
    return ((n + 7) // 8) * 8


def _sconv1d_gn_relu_kernel(x_ref, p_ref, o_ref, slab_ref, *,
                            N, C_in, L, K, pad, groups, eps):
    # x_ref : (N, C_in, L)                raw input, untouched by XLA
    # p_ref : (out_ch, RW + out_ch + 2)   [ W(+bias col) | P | gamma | beta ]
    # o_ref : (out_ch, lanes)             lane-dense output slab
    # slab_ref: (RW, lanes) VMEM scratch  in-kernel im2col slab
    out_ch, lanes = o_ref.shape
    CP = _round8(C_in)               # per-tap channel block (one sublane tile)
    Lp = L + 2 * pad                 # padded length = per-batch lane stride
    L_out = Lp - K + 1               # conv output length
    cpg = out_ch // groups
    RW = K * CP + 1                  # K padded taps + ones (bias) row

    # ---- build im2col slab in VMEM scratch (no XLA plumbing) ---------------
    # slab[k*CP + c, n*Lp + l] = xpad[n, c, l + k];  slab[K*CP, :] = 1 (bias row)
    slab_ref[...] = jnp.zeros_like(slab_ref)
    slab_ref[K * CP:K * CP + 1, :] = jnp.ones((1, lanes), jnp.float32)
    for n in range(N):               # static loops: N*K single-tile masked stores
        for k in range(K):
            j0 = max(0, k - pad)                     # valid source x columns
            j1 = min(L, L_out + k - pad)
            if j1 > j0:
                c0 = n * Lp + j0 + pad - k           # destination lane offset
                slab_ref[k * CP:k * CP + C_in, c0:c0 + (j1 - j0)] = \
                    x_ref[n, :, j0:j1]

    # ---- unpack the single packed-params ref (static register slices) ------
    pfull = p_ref[...]
    w2 = pfull[:, :RW]                                # (out_ch, RW), bias folded
    pmat = pfull[:, RW:RW + out_ch]                   # group-membership matrix
    gamma = pfull[:, RW + out_ch:RW + out_ch + 1]     # (out_ch, 1)
    beta = pfull[:, RW + out_ch + 1:RW + out_ch + 2]  # (out_ch, 1)

    # ---- Conv1d + bias: ONE im2col matmul ----------------------------------
    y = jnp.dot(w2, slab_ref[...], preferred_element_type=jnp.float32)

    # ---- 0/1 lane-selection matrices: batch n <-> lanes [n*Lp, n*Lp+L_out) --
    cN = jax.lax.broadcasted_iota(jnp.int32, (N, lanes), 1)
    sN = jax.lax.broadcasted_iota(jnp.int32, (N, lanes), 0) * Lp
    sel = jnp.where((cN >= sN) & (cN < sN + L_out), 1.0, 0.0)     # (N, lanes)
    rT = jax.lax.broadcasted_iota(jnp.int32, (lanes, N), 0)
    sT = jax.lax.broadcasted_iota(jnp.int32, (lanes, N), 1) * Lp
    selT = jnp.where((rT >= sT) & (rT < sT + L_out), 1.0, 0.0)    # (lanes, N)

    # ---- GroupNorm moments per (channel, batch) on the MXU ------------------
    s1 = jnp.dot(y, selT, preferred_element_type=jnp.float32)      # (out_ch, N)
    s2 = jnp.dot(y * y, selT, preferred_element_type=jnp.float32)  # (out_ch, N)

    # group reduce + scatter-back: one MXU push per moment
    g1 = jnp.dot(pmat, s1, preferred_element_type=jnp.float32)
    g2 = jnp.dot(pmat, s2, preferred_element_type=jnp.float32)

    inv_cnt = 1.0 / float(cpg * L_out)
    mean = g1 * inv_cnt
    var = jnp.maximum(g2 * inv_cnt - mean * mean, 0.0)   # guard cancellation
    scale = gamma * jax.lax.rsqrt(var + eps)             # gamma folded in
    shift = beta - mean * scale                          # (out_ch, N)

    # expand (out_ch, N) -> (out_ch, lanes) on the MXU via sel
    scale_full = jnp.dot(scale, sel, preferred_element_type=jnp.float32)
    shift_full = jnp.dot(shift, sel, preferred_element_type=jnp.float32)

    # ---- normalize + affine + ReLU: one full-width unmasked lane store ------
    o_ref[...] = jnp.maximum(y * scale_full + shift_full, 0.0)


def make_sconv_1d(w, b, gamma, beta, *, groups=6, pad=1, eps=1e-5):
    """Build SConv_1D forward.  All call-invariant prep is hoisted here."""
    out_ch, C_in, K = w.shape
    assert out_ch % groups == 0
    CP = _round8(C_in)
    RW = K * CP + 1

    # packed params: [ W (col k*CP+c) | bias col | P | gamma | beta ]
    w_pad = jnp.pad(w.astype(jnp.float32), ((0, 0), (0, CP - C_in), (0, 0)))
    w2 = jnp.transpose(w_pad, (0, 2, 1)).reshape(out_ch, K * CP)
    cg = jnp.arange(out_ch) // (out_ch // groups)
    pmat = (cg[:, None] == cg[None, :]).astype(jnp.float32)
    params = jnp.concatenate(
        [w2,
         b.reshape(out_ch, 1).astype(jnp.float32),
         pmat,
         gamma.reshape(out_ch, 1).astype(jnp.float32),
         beta.reshape(out_ch, 1).astype(jnp.float32)], axis=1)

    @jax.jit
    def apply(x):
        N, c_in, L = x.shape
        assert c_in == C_in
        Lp = L + 2 * pad
        L_out = Lp - K + 1
        lanes = max(128, ((N * Lp + 127) // 128) * 128)

        kernel = functools.partial(
            _sconv1d_gn_relu_kernel,
            N=N, C_in=C_in, L=L, K=K, pad=pad, groups=groups, eps=eps)
        vmem = pl.BlockSpec(memory_space=pltpu.MemorySpace.VMEM)
        out_slab = pl.pallas_call(
            kernel,
            out_shape=jax.ShapeDtypeStruct((out_ch, lanes), jnp.float32),
            in_specs=[vmem, vmem],
            out_specs=vmem,
            scratch_shapes=[pltpu.VMEM((RW, lanes), jnp.float32)],
        )(x.astype(jnp.float32), params)

        # Layout plumbing back to (N, out_ch, L_out); kept under the same jit.
        # A fused consumer should read the lane-dense slab directly instead.
        out = out_slab[:, :N * Lp].reshape(out_ch, N, Lp)[:, :, :L_out]
        return jnp.transpose(out, (1, 0, 2))

    return apply


def reference(x, w, b, gamma, beta, *, groups=6, pad=1, eps=1e-5):
    """Pure-JAX reference matching PyTorch Conv1d -> GroupNorm -> ReLU."""
    N, C_in, L = x.shape
    out_ch, _, K = w.shape
    xp = jnp.pad(x, ((0, 0), (0, 0), (pad, pad)))
    L_out = L + 2 * pad - K + 1
    y = jnp.zeros((N, out_ch, L_out), jnp.float32)
    for k in range(K):
        y = y + jnp.einsum('oi,nil->nol', w[:, :, k], xp[:, :, k:k + L_out])
    y = y + b[None, :, None]
    cpg = out_ch // groups
    yg = y.reshape(N, groups, cpg, L_out)
    mean = yg.mean(axis=(2, 3), keepdims=True)
    var = yg.var(axis=(2, 3), keepdims=True)
    yn = ((yg - mean) / jnp.sqrt(var + eps)).reshape(N, out_ch, L_out)
    return jnp.maximum(gamma[None, :, None] * yn + beta[None, :, None], 0.0)


if __name__ == "__main__":
    # Module config: SConv_1D(in_ch=4, out_ch=12, kernel=3, pad=1)
    # (out_ch must be divisible by 6 for GroupNorm(6, out_ch)).
    N, C_in, L = 2, 4, 16
    out_ch, K, pad = 12, 3, 1

    key = jax.random.PRNGKey(0)
    kx, kw, kb, kg, kbt = jax.random.split(key, 5)
    x = jax.random.normal(kx, (N, C_in, L), jnp.float32)
    w = jax.random.normal(kw, (out_ch, C_in, K), jnp.float32) * 0.3
    b = jax.random.normal(kb, (out_ch,), jnp.float32) * 0.1
    gamma = 1.0 + 0.1 * jax.random.normal(kg, (out_ch,), jnp.float32)
    beta = 0.1 * jax.random.normal(kbt, (out_ch,), jnp.float32)

    sconv = make_sconv_1d(w, b, gamma, beta, groups=6, pad=pad)
    out = jax.block_until_ready(sconv(x))

    ref = reference(x, w, b, gamma, beta, groups=6, pad=pad)
    assert out.shape == (N, out_ch, L)  # same-length conv (K=3, pad=1)
    assert jnp.allclose(out, ref, atol=1e-4, rtol=1e-4), "mismatch vs reference"

    print("KERNEL_OK")
</pallas_src>

<mosaic_0001>
module attributes {stable_mosaic.version = 11 : i64} {
  func.func @_sconv1d_gn_relu_kernel(%arg0: memref<2x4x16xf32, #tpu.memory_space<vmem>>, %arg1: memref<12x39xf32, #tpu.memory_space<vmem>>, %arg2: memref<12x128xf32, #tpu.memory_space<vmem>>, %arg3: memref<25x128xf32, #tpu.memory_space<vmem>>) attributes {dimension_semantics = [], scalar_prefetch = 0 : i64, scratch_operands = 1 : i64, tpu.core_type = #tpu.core_type<tc>} {
    %cst = arith.constant 0.000000e+00 : f32
    %0 = vector.broadcast %cst : f32 to vector<25x128xf32>
    %c0 = arith.constant 0 : index
    %c0_0 = arith.constant 0 : index
    %1 = vector.load %arg3[%c0, %c0_0] : memref<25x128xf32, #tpu.memory_space<vmem>>, vector<25x128xf32>
    tpu.vector_store %arg3[%c0, %c0_0], %0 {strides = array<i32>} : memref<25x128xf32, #tpu.memory_space<vmem>>, vector<25x128xf32>,
    %cst_1 = arith.constant 1.000000e+00 : f32
    %2 = vector.broadcast %cst_1 : f32 to vector<1x128xf32>
    %c24 = arith.constant 24 : index
    %c0_2 = arith.constant 0 : index
    %3 = vector.load %arg3[%c24, %c0_2] : memref<25x128xf32, #tpu.memory_space<vmem>>, vector<1x128xf32>
    tpu.vector_store %arg3[%c24, %c0_2], %2 {strides = array<i32>} : memref<25x128xf32, #tpu.memory_space<vmem>>, vector<1x128xf32>,
    %c0_3 = arith.constant 0 : index
    %c0_4 = arith.constant 0 : index
    %c0_5 = arith.constant 0 : index
    %4 = vector.load %arg0[%c0_3, %c0_4, %c0_5] : memref<2x4x16xf32, #tpu.memory_space<vmem>>, vector<1x4x15xf32>
    %5 = vector.shape_cast %4 : vector<1x4x15xf32> to vector<4x15xf32>
    %c0_6 = arith.constant 0 : index
    %c1 = arith.constant 1 : index
    %6 = vector.load %arg3[%c0_6, %c1] : memref<25x128xf32, #tpu.memory_space<vmem>>, vector<4x15xf32>
    tpu.vector_store %arg3[%c0_6, %c1], %5 {strides = array<i32>} : memref<25x128xf32, #tpu.memory_space<vmem>>, vector<4x15xf32>,
    %c0_7 = arith.constant 0 : index
    %c0_8 = arith.constant 0 : index
    %c0_9 = arith.constant 0 : index
    %7 = vector.load %arg0[%c0_7, %c0_8, %c0_9] : memref<2x4x16xf32, #tpu.memory_space<vmem>>, vector<1x4x16xf32>
    %8 = vector.shape_cast %7 : vector<1x4x16xf32> to vector<4x16xf32>
    %c8 = arith.constant 8 : index
    %c0_10 = arith.constant 0 : index
    %9 = vector.load %arg3[%c8, %c0_10] : memref<25x128xf32, #tpu.memory_space<vmem>>, vector<4x16xf32>
    tpu.vector_store %arg3[%c8, %c0_10], %8 {strides = array<i32>} : memref<25x128xf32, #tpu.memory_space<vmem>>, vector<4x16xf32>,
    %c0_11 = arith.constant 0 : index
    %c0_12 = arith.constant 0 : index
    %c1_13 = arith.constant 1 : index
    %10 = vector.load %arg0[%c0_11, %c0_12, %c1_13] : memref<2x4x16xf32, #tpu.memory_space<vmem>>, vector<1x4x15xf32>
    %11 = vector.shape_cast %10 : vector<1x4x15xf32> to vector<4x15xf32>
    %c16 = arith.constant 16 : index
    %c0_14 = arith.constant 0 : index
    %12 = vector.load %arg3[%c16, %c0_14] : memref<25x128xf32, #tpu.memory_space<vmem>>, vector<4x15xf32>
    tpu.vector_store %arg3[%c16, %c0_14], %11 {strides = array<i32>} : memref<25x128xf32, #tpu.memory_space<vmem>>, vector<4x15xf32>,
    %c1_15 = arith.constant 1 : index
    %c0_16 = arith.constant 0 : index
    %c0_17 = arith.constant 0 : index
    %13 = vector.load %arg0[%c1_15, %c0_16, %c0_17] : memref<2x4x16xf32, #tpu.memory_space<vmem>>, vector<1x4x15xf32>
    %14 = vector.shape_cast %13 : vector<1x4x15xf32> to vector<4x15xf32>
    %c0_18 = arith.constant 0 : index
    %c19 = arith.constant 19 : index
    %15 = vector.load %arg3[%c0_18, %c19] : memref<25x128xf32, #tpu.memory_space<vmem>>, vector<4x15xf32>
    tpu.vector_store %arg3[%c0_18, %c19], %14 {strides = array<i32>} : memref<25x128xf32, #tpu.memory_space<vmem>>, vector<4x15xf32>,
    %c1_19 = arith.constant 1 : index
    %c0_20 = arith.constant 0 : index
    %c0_21 = arith.constant 0 : index
    %16 = vector.load %arg0[%c1_19, %c0_20, %c0_21] : memref<2x4x16xf32, #tpu.memory_space<vmem>>, vector<1x4x16xf32>
    %17 = vector.shape_cast %16 : vector<1x4x16xf32> to vector<4x16xf32>
    %c8_22 = arith.constant 8 : index
    %c18 = arith.constant 18 : index
    %18 = vector.load %arg3[%c8_22, %c18] : memref<25x128xf32, #tpu.memory_space<vmem>>, vector<4x16xf32>
    tpu.vector_store %arg3[%c8_22, %c18], %17 {strides = array<i32>} : memref<25x128xf32, #tpu.memory_space<vmem>>, vector<4x16xf32>,
    %c1_23 = arith.constant 1 : index
    %c0_24 = arith.constant 0 : index
    %c1_25 = arith.constant 1 : index
    %19 = vector.load %arg0[%c1_23, %c0_24, %c1_25] : memref<2x4x16xf32, #tpu.memory_space<vmem>>, vector<1x4x15xf32>
    %20 = vector.shape_cast %19 : vector<1x4x15xf32> to vector<4x15xf32>
    %c16_26 = arith.constant 16 : index
    %c18_27 = arith.constant 18 : index
    %21 = vector.load %arg3[%c16_26, %c18_27] : memref<25x128xf32, #tpu.memory_space<vmem>>, vector<4x15xf32>
    tpu.vector_store %arg3[%c16_26, %c18_27], %20 {strides = array<i32>} : memref<25x128xf32, #tpu.memory_space<vmem>>, vector<4x15xf32>,
    %c0_28 = arith.constant 0 : index
    %c0_29 = arith.constant 0 : index
    %22 = vector.load %arg1[%c0_28, %c0_29] : memref<12x39xf32, #tpu.memory_space<vmem>>, vector<12x39xf32>
    %23 = vector.extract_strided_slice %22 {offsets = [0, 0], sizes = [12, 25], strides = [1, 1]} : vector<12x39xf32> to vector<12x25xf32>
    %24 = vector.extract_strided_slice %22 {offsets = [0, 25], sizes = [12, 12], strides = [1, 1]} : vector<12x39xf32> to vector<12x12xf32>
    %25 = vector.extract_strided_slice %22 {offsets = [0, 37], sizes = [12, 1], strides = [1, 1]} : vector<12x39xf32> to vector<12x1xf32>
    %26 = vector.extract_strided_slice %22 {offsets = [0, 38], sizes = [12, 1], strides = [1, 1]} : vector<12x39xf32> to vector<12x1xf32>
    %c0_30 = arith.constant 0 : index
    %c0_31 = arith.constant 0 : index
    %27 = vector.load %arg3[%c0_30, %c0_31] : memref<25x128xf32, #tpu.memory_space<vmem>>, vector<25x128xf32>
    %cst_32 = arith.constant dense<0.000000e+00> : vector<12x128xf32>
    %28 = tpu.matmul %23, %27, %cst_32 {dimension_numbers = #tpu.dot_dimension_numbers<[1], [0], [0], [1], [0, 0, 1, 1], [], []>} : vector<12x25xf32>, vector<25x128xf32>, vector<12x128xf32> -> vector<12x128xf32>
    %29 = tpu.iota {dimensions = array<i32: 1>} : vector<2x128xi32>
    %30 = tpu.iota {dimensions = array<i32: 0>} : vector<2x128xi32>
    %c18_i32 = arith.constant 18 : i32
    %31 = vector.broadcast %c18_i32 : i32 to vector<2x128xi32>
    %32 = arith.muli %30, %31 : vector<2x128xi32>
    %33 = arith.cmpi sge, %29, %32 : vector<2x128xi32>
    %c16_i32 = arith.constant 16 : i32
    %34 = vector.broadcast %c16_i32 : i32 to vector<2x128xi32>
    %35 = arith.addi %32, %34 : vector<2x128xi32>
    %36 = arith.cmpi slt, %29, %35 : vector<2x128xi32>
    %37 = arith.andi %33, %36 : vector<2x128xi1>
    %cst_33 = arith.constant 1.000000e+00 : f32
    %cst_34 = arith.constant 0.000000e+00 : f32
    %38 = vector.broadcast %cst_33 : f32 to vector<2x128xf32>
    %39 = vector.broadcast %cst_34 : f32 to vector<2x128xf32>
    %40 = arith.select %37, %38, %39 : vector<2x128xi1>, vector<2x128xf32>
    %41 = tpu.iota {dimensions = array<i32: 0>} : vector<128x2xi32>
    %42 = tpu.iota {dimensions = array<i32: 1>} : vector<128x2xi32>
    %c18_i32_35 = arith.constant 18 : i32
    %43 = vector.broadcast %c18_i32_35 : i32 to vector<128x2xi32>
    %44 = arith.muli %42, %43 : vector<128x2xi32>
    %45 = arith.cmpi sge, %41, %44 : vector<128x2xi32>
    %c16_i32_36 = arith.constant 16 : i32
    %46 = vector.broadcast %c16_i32_36 : i32 to vector<128x2xi32>
    %47 = arith.addi %44, %46 : vector<128x2xi32>
    %48 = arith.cmpi slt, %41, %47 : vector<128x2xi32>
    %49 = arith.andi %45, %48 : vector<128x2xi1>
    %cst_37 = arith.constant 1.000000e+00 : f32
    %cst_38 = arith.constant 0.000000e+00 : f32
    %50 = vector.broadcast %cst_37 : f32 to vector<128x2xf32>
    %51 = vector.broadcast %cst_38 : f32 to vector<128x2xf32>
    %52 = arith.select %49, %50, %51 : vector<128x2xi1>, vector<128x2xf32>
    %cst_39 = arith.constant dense<0.000000e+00> : vector<12x2xf32>
    %53 = tpu.matmul %28, %52, %cst_39 {dimension_numbers = #tpu.dot_dimension_numbers<[1], [0], [0], [1], [0, 0, 1, 1], [], []>} : vector<12x128xf32>, vector<128x2xf32>, vector<12x2xf32> -> vector<12x2xf32>
    %54 = arith.mulf %28, %28 : vector<12x128xf32>
    %cst_40 = arith.constant dense<0.000000e+00> : vector<12x2xf32>
    %55 = tpu.matmul %54, %52, %cst_40 {dimension_numbers = #tpu.dot_dimension_numbers<[1], [0], [0], [1], [0, 0, 1, 1], [], []>} : vector<12x128xf32>, vector<128x2xf32>, vector<12x2xf32> -> vector<12x2xf32>
    %cst_41 = arith.constant dense<0.000000e+00> : vector<12x2xf32>
    %56 = tpu.matmul %24, %53, %cst_41 {dimension_numbers = #tpu.dot_dimension_numbers<[1], [0], [0], [1], [0, 0, 1, 1], [], []>} : vector<12x12xf32>, vector<12x2xf32>, vector<12x2xf32> -> vector<12x2xf32>
    %cst_42 = arith.constant dense<0.000000e+00> : vector<12x2xf32>
    %57 = tpu.matmul %24, %55, %cst_42 {dimension_numbers = #tpu.dot_dimension_numbers<[1], [0], [0], [1], [0, 0, 1, 1], [], []>} : vector<12x12xf32>, vector<12x2xf32>, vector<12x2xf32> -> vector<12x2xf32>
    %cst_43 = arith.constant 3.125000e-02 : f32
    %58 = vector.broadcast %cst_43 : f32 to vector<12x2xf32>
    %59 = arith.mulf %56, %58 : vector<12x2xf32>
    %cst_44 = arith.constant 3.125000e-02 : f32
    %60 = vector.broadcast %cst_44 : f32 to vector<12x2xf32>
    %61 = arith.mulf %57, %60 : vector<12x2xf32>
    %62 = arith.mulf %59, %59 : vector<12x2xf32>
    %63 = arith.subf %61, %62 : vector<12x2xf32>
    %cst_45 = arith.constant 0.000000e+00 : f32
    %64 = vector.broadcast %cst_45 : f32 to vector<12x2xf32>
    %65 = arith.maximumf %63, %64 : vector<12x2xf32>
    %cst_46 = arith.constant 9.99999974E-6 : f32
    %66 = vector.broadcast %cst_46 : f32 to vector<12x2xf32>
    %67 = arith.addf %65, %66 : vector<12x2xf32>
    %68 = math.rsqrt %67 : vector<12x2xf32>
    %69 = vector.broadcast %25 : vector<12x1xf32> to vector<12x2xf32>
    %70 = arith.mulf %69, %68 : vector<12x2xf32>
    %71 = arith.mulf %59, %70 : vector<12x2xf32>
    %72 = vector.broadcast %26 : vector<12x1xf32> to vector<12x2xf32>
    %73 = arith.subf %72, %71 : vector<12x2xf32>
    %cst_47 = arith.constant dense<0.000000e+00> : vector<12x128xf32>
    %74 = tpu.matmul %70, %40, %cst_47 {dimension_numbers = #tpu.dot_dimension_numbers<[1], [0], [0], [1], [0, 0, 1, 1], [], []>} : vector<12x2xf32>, vector<2x128xf32>, vector<12x128xf32> -> vector<12x128xf32>
    %cst_48 = arith.constant dense<0.000000e+00> : vector<12x128xf32>
    %75 = tpu.matmul %73, %40, %cst_48 {dimension_numbers = #tpu.dot_dimension_numbers<[1], [0], [0], [1], [0, 0, 1, 1], [], []>} : vector<12x2xf32>, vector<2x128xf32>, vector<12x128xf32> -> vector<12x128xf32>
    %76 = arith.mulf %28, %74 : vector<12x128xf32>
    %77 = arith.addf %76, %75 : vector<12x128xf32>
    %cst_49 = arith.constant 0.000000e+00 : f32
    %78 = vector.broadcast %cst_49 : f32 to vector<12x128xf32>
    %79 = arith.maximumf %77, %78 : vector<12x128xf32>
    %c0_50 = arith.constant 0 : index
    %c0_51 = arith.constant 0 : index
    %80 = vector.load %arg2[%c0_50, %c0_51] : memref<12x128xf32, #tpu.memory_space<vmem>>, vector<12x128xf32>
    tpu.vector_store %arg2[%c0_50, %c0_51], %79 {strides = array<i32>} : memref<12x128xf32, #tpu.memory_space<vmem>>, vector<12x128xf32>,
    return
  }
}

</mosaic_0001>

<llo_original>
// kernel: apply.1
$region0: #{apply.1}
  #allocation0 [shape = 'u32[]', space=smem, size = 0x4, offset = 0x4, fixed_abs, tag = 'smem constant byte address 0x4 - core index']
  #allocation1 [shape = 'u32[144,128]{1,0:T(1,128)}', space=vmem, size = 0x12000, scoped, tag = 'internal scratch']
  #allocation2 [shape = 'f32[25,128]{1,0:T(8,128)}', space=vmem, size = 0x4000, scoped, tag = 'scratch operand']
  %s0 = inlined_call_operand.hbm [shape: f32[2,4,16], index: 0, kind: input, shape index: {}]
  %s1 = inlined_call_operand.hbm [shape: f32[12,39], index: 1, kind: input, shape index: {}]
  %s2 = inlined_call_operand.vmem [shape: f32[12,128], index: 2, kind: output, shape index: {}]
  %s3 = sld [smem:[#allocation0]]
  $region26: #{apply.1} parent=0
    _
  %s5 = ssub.s32 1, %s3
  %s6 = scalar_select 0, %s5, %s3
  $region1: #{apply.1} parent=0
    #allocation3 [shape = 'u8[4096]{0}', space=vmem, size = 0x1000, scoped, tag = 'input window, operand 0, single buffered']
    #allocation4 [shape = 's32[1]{0}', space=sflag, size = 0x4, scoped, tag = 'scoped memory for apply.1']
    #allocation5 [shape = 'u8[8192]{0}', space=vmem, size = 0x2000, scoped, tag = 'input window, operand 1, single buffered']
    #allocation6 [shape = 's32[1]{0}', space=sflag, size = 0x4, scoped, tag = 'scoped memory for apply.1']
    %7 = vsyncpa [#allocation4], 0
    %8 = vsyncpa [#allocation6], 0
    // Predicated region
    $region2: #{apply.1} parent=1 // pred_check
      _
    $region3: #{apply.1} parent=1 // pred_check_branch
      %10 = sbr.rel (0) target = $region5
    $region4: #{apply.1} parent=1 // pred_region
      %s12 = ssub.s32 128, 128
      %13 = vsyncadd [#allocation4], %s12
      %s14 = sshll.u32 [#allocation3], 4
      %s15 = int_to_ptr.vmem [resolvable:$true] %s14
      %20 = dma.hbm_to_vmem [thread:$0]  %s0, 128, %s15, [#allocation4], 64, 64, 4
    $region5: #{apply.1} parent=1 // pred_fallthru
      _
    // Predicated region
    $region6: #{apply.1} parent=1 // pred_check
      _
    $region7: #{apply.1} parent=1 // pred_check_branch
      %22 = sbr.rel (0) target = $region9
    $region8: #{apply.1} parent=1 // pred_region
      %s24 = ssub.s32 256, 256
      %25 = vsyncadd [#allocation6], %s24
      %s26 = sshll.u32 [#allocation5], 4
      %s27 = int_to_ptr.vmem [resolvable:$true] %s26
      %32 = dma.hbm_to_vmem [thread:$0]  %s1, 256, %s27, [#allocation6], 128, 128, 8
    $region9: #{apply.1} parent=1 // pred_fallthru
      _
    // Predicated region
    $region10: #{apply.1} parent=1 // pred_check
      _
    $region11: #{apply.1} parent=1 // pred_check_branch
      %34 = sbr.rel (0) target = $region13
    $region12: #{apply.1} parent=1 // pred_region
      %35 = dma.done [#allocation4], 128
    $region13: #{apply.1} parent=1 // pred_fallthru
      _
    // Predicated region
    $region14: #{apply.1} parent=1 // pred_check
      _
    $region15: #{apply.1} parent=1 // pred_check_branch
      %37 = sbr.rel (0) target = $region17
    $region16: #{apply.1} parent=1 // pred_region
      %38 = dma.done [#allocation6], 256
    $region17: #{apply.1} parent=1 // pred_fallthru
      _
    %39 = vst [vmem:[#allocation2] sm:$0xff] 0.0
    %40 = vst [vmem:[#allocation2 + $0x8] sm:$0xff] 0.0
    %41 = vst [vmem:[#allocation2 + $0x10] sm:$0xff] 0.0
    %42 = vst [vmem:[#allocation2 + $0x18] sm:$0x1] 0.0
    %43 = vst [vmem:[#allocation2 + $0x18] sm:$0x1] 1.0
    %v44 = vld [vmem:[#allocation3] sm:$0xf]
    %46 = vrot.lane.b32.xlu0 %v44, 1
    %v47 = vpop.permute.xlu0 %46
    %vm49 = vcmask 125960
    %50 = vst.msk [vmem:[#allocation2] sm:$0xf] %vm49, %v47
    %v51 = vld [vmem:[#allocation3] sm:$0xf]
    %vm52 = vcmask 125952
    %53 = vst.msk [vmem:[#allocation2 + $0x8] sm:$0xf] %vm52, %v51
    %v54 = vld [vmem:[#allocation3] sm:$0xf]
    %56 = vrot.lane.b32.xlu0 %v54, 127
    %v57 = vpop.permute.xlu0 %56
    %vm59 = vcmask 117760
    %60 = vst.msk [vmem:[#allocation2 + $0x10] sm:$0xf] %vm59, %v57
    %s61 = scalar_lea.vmem [#allocation3], 4
    %v62 = vld [vmem:[%s61] sm:$0xf]
    %64 = vrot.lane.b32.xlu0 %v62, 19
    %v65 = vpop.permute.xlu0 %64
    %vm67 = vcmask 273560
    %68 = vst.msk [vmem:[#allocation2] sm:$0xf] %vm67, %v65
    %v69 = vld [vmem:[%s61] sm:$0xf]
    %71 = vrot.lane.b32.xlu0 %v69, 18
    %v72 = vpop.permute.xlu0 %71
    %vm74 = vcmask 273552
    %75 = vst.msk [vmem:[#allocation2 + $0x8] sm:$0xf] %vm74, %v72
    %v76 = vld [vmem:[%s61] sm:$0xf]
    %78 = vrot.lane.b32.xlu0 %v76, 17
    %v79 = vpop.permute.xlu0 %78
    %vm81 = vcmask 265360
    %82 = vst.msk [vmem:[#allocation2 + $0x10] sm:$0xf] %vm81, %v79
    %v83 = vld [vmem:[#allocation5] sm:$0xff]
    %v84 = vld [vmem:[#allocation5 + $0x8] sm:$0xf]
    %v85 = vld [vmem:[#allocation2] sm:$0xff]
    %v86 = vld [vmem:[#allocation2 + $0x8] sm:$0xff]
    %v87 = vld [vmem:[#allocation2 + $0x10] sm:$0xff]
    %v88 = vld [vmem:[#allocation2 + $0x18] sm:$0x1]
    %vm89 = vcmask 203776
    %v91 = vsel %vm89, %v83, 0
    %v94 = vsel %vm89, %v84, 0
    %vm96 = vcmask 1040384
    %v98 = vsel %vm96, %v88, 0
    %100 = vmatprep.subr.mxu0 0.0
    %101 = vmatpush1.msra.mxu0 %v85
    %102 = vmatprep.subr.mxu0 0.0
    %103 = vmatpush1.msra.mxu0 %v86
    %104 = vmatprep.subr.mxu0 0.0
    %105 = vmatpush1.msra.mxu0 %v87
    %106 = vmatprep.subr.mxu0 0.0
    %107 = vmatpush1.msra.mxu0 %v98
    %108 = vmatprep.subr.mxu0 0.0
    %109 = vmatpush1.msra.mxu0 0.0
    %110 = vmatprep.subr.mxu0 0.0
    %111 = vmatpush1.msra.mxu0 0.0
    %112 = vmatprep.subr.mxu0 0.0
    %113 = vmatpush1.msra.mxu0 0.0
    %114 = vmatprep.subr.mxu0 0.0
    %115 = vmatpush1.msra.mxu0 0.0
    %116 = vmatprep.subr.mxu0 0.0
    %117 = vmatpush1.msra.mxu0 0.0
    %118 = vmatprep.subr.mxu0 0.0
    %119 = vmatpush1.msra.mxu0 0.0
    %120 = vmatprep.subr.mxu0 0.0
    %121 = vmatpush1.msra.mxu0 0.0
    %122 = vmatprep.subr.mxu0 0.0
    %123 = vmatpush1.msra.mxu0 0.0
    %124 = vmatprep.subr.mxu0 0.0
    %125 = vmatpush1.msra.mxu0 0.0
    %126 = vmatprep.subr.mxu0 0.0
    %127 = vmatpush1.msra.mxu0 0.0
    %128 = vmatprep.subr.mxu0 0.0
    %129 = vmatpush1.msra.mxu0 0.0
    %130 = vmatprep.subr.mxu0 0.0
    %131 = vmatpush1.msra.mxu0 0.0
    %132 = vmatprep.subr.mxu0 0.0
    %133 = vmatpush1.msra.mxu0 0.0
    %134 = vmatprep.subr.mxu0 0.0
    %135 = vmatpush1.msra.mxu0 0.0
    %136 = vmatprep.subr.mxu0 0.0
    %137 = vmatpush1.msra.mxu0 0.0
    %138 = vmatprep.subr.mxu0 0.0
    %139 = vmatpush1.msra.mxu0 0.0
    %140 = vmatprep.subr.mxu0 0.0
    %141 = vmatpush1.msra.mxu0 0.0
    %142 = vmatprep.subr.mxu0 0.0
    %143 = vmatpush1.msra.mxu0 0.0
    %144 = vmatprep.subr.mxu0 0.0
    %145 = vmatpush1.msra.mxu0 0.0
    %146 = vmatprep.subr.mxu0 0.0
    %147 = vmatpush1.msra.mxu0 0.0
    %148 = vmatprep.subr.mxu0 0.0
    %149 = vmatpush1.msra.mxu0 0.0
    %150 = vmatprep.subr.mxu0 0.0
    %151 = vmatpush1.msra.mxu0 0.0
    %152 = vmatprep.subr.mxu0 0.0
    %153 = vmatpush1.msra.mxu0 0.0
    %154 = vmatprep.subr.mxu0 0.0
    %155 = vmatpush1.msra.mxu0 0.0
    %156 = vmatprep.subr.mxu0 0.0
    %157 = vmatpush1.msra.mxu0 0.0
    %158 = vmatprep.subr.mxu0 0.0
    %159 = vmatpush1.msra.mxu0 0.0
    %160 = vmatprep.subr.mxu0 0.0
    %161 = vmatpush1.msra.mxu0 0.0
    %162 = vmatprep.subr.mxu0 0.0
    %163 = vmatpush1.msra.mxu0 0.0
    %164 = vmatprep.mubr.f32.mxu0 0.0
    %165 = vmatmul.mubr.f32.gmra.mrb[0].mxu0 %v91
    %v166 = vpop.f32.mrb[0].mxu0
    %v167 = vadd.f32 0.0, %v166
    %v168 = vpop.f32.mrb[0].mxu0
    %169 = vmatprep.mubr.f32.mxu0 0.0
    %170 = vmatmul.mubr.f32.gmra.mrb[0].mxu0 %v94
    %v171 = vpop.f32.mrb[0].mxu0
    %v172 = vadd.f32 0.0, %v171
    %v173 = vpop.f32.mrb[0].mxu0
    %174 = vdwg.mxu0
    %v175 = vlaneseq
    %v176 = vand.u32 %v175, 127
    %v177 = vlaneseq
    %v178 = vshrl.u32 %v177, 7
    %v179 = vmul.u32 %v178, 18
    %vm180 = vcmp.ge.s32.totalorder %v176, %v179
    %v181 = vadd.s32 %v179, 16
    %vm182 = vcmp.lt.s32.totalorder %v176, %v181
    %vm183 = vmand %vm180, %vm182
    %v184 = vsel %vm183, 1.0, 0.0
    %v185 = vadd.s32 %v178, 8
    %v186 = vadd.s32 %v178, 16
    %v187 = vadd.s32 %v178, 24
    %v188 = vadd.s32 %v178, 32
    %v189 = vadd.s32 %v178, 40
    %v190 = vadd.s32 %v178, 48
    %v191 = vadd.s32 %v178, 56
    %v192 = vadd.s32 %v178, 64
    %v193 = vadd.s32 %v178, 72
    %v194 = vadd.s32 %v178, 80
    %v195 = vadd.s32 %v178, 88
    %v196 = vadd.s32 %v178, 96
    %v197 = vadd.s32 %v178, 104
    %v198 = vadd.s32 %v178, 112
    %v199 = vadd.s32 %v178, 120
    %v200 = vmul.u32 %v176, 18
    %vm201 = vcmp.ge.s32.totalorder %v178, %v200
    %vm202 = vcmp.ge.s32.totalorder %v185, %v200
    %vm203 = vcmp.ge.s32.totalorder %v186, %v200
    %vm204 = vcmp.ge.s32.totalorder %v187, %v200
    %vm205 = vcmp.ge.s32.totalorder %v188, %v200
    %vm206 = vcmp.ge.s32.totalorder %v189, %v200
    %vm207 = vcmp.ge.s32.totalorder %v190, %v200
    %vm208 = vcmp.ge.s32.totalorder %v191, %v200
    %vm209 = vcmp.ge.s32.totalorder %v192, %v200
    %vm210 = vcmp.ge.s32.totalorder %v193, %v200
    %vm211 = vcmp.ge.s32.totalorder %v194, %v200
    %vm212 = vcmp.ge.s32.totalorder %v195, %v200
    %vm213 = vcmp.ge.s32.totalorder %v196, %v200
    %vm214 = vcmp.ge.s32.totalorder %v197, %v200
    %vm215 = vcmp.ge.s32.totalorder %v198, %v200
    %vm216 = vcmp.ge.s32.totalorder %v199, %v200
    %v217 = vadd.s32 %v200, 16
    %vm218 = vcmp.lt.s32.totalorder %v178, %v217
    %vm219 = vcmp.lt.s32.totalorder %v185, %v217
    %vm220 = vcmp.lt.s32.totalorder %v186, %v217
    %vm221 = vcmp.lt.s32.totalorder %v187, %v217
    %vm222 = vcmp.lt.s32.totalorder %v188, %v217
    %vm223 = vcmp.lt.s32.totalorder %v189, %v217
    %vm224 = vcmp.lt.s32.totalorder %v190, %v217
    %vm225 = vcmp.lt.s32.totalorder %v191, %v217
    %vm226 = vcmp.lt.s32.totalorder %v192, %v217
    %vm227 = vcmp.lt.s32.totalorder %v193, %v217
    %vm228 = vcmp.lt.s32.totalorder %v194, %v217
    %vm229 = vcmp.lt.s32.totalorder %v195, %v217
    %vm230 = vcmp.lt.s32.totalorder %v196, %v217
    %vm231 = vcmp.lt.s32.totalorder %v197, %v217
    %vm232 = vcmp.lt.s32.totalorder %v198, %v217
    %vm233 = vcmp.lt.s32.totalorder %v199, %v217
    %vm234 = vmand %vm201, %vm218
    %vm235 = vmand %vm202, %vm219
    %vm236 = vmand %vm203, %vm220
    %vm237 = vmand %vm204, %vm221
    %vm238 = vmand %vm205, %vm222
    %vm239 = vmand %vm206, %vm223
    %vm240 = vmand %vm207, %vm224
    %vm241 = vmand %vm208, %vm225
    %vm242 = vmand %vm209, %vm226
    %vm243 = vmand %vm210, %vm227
    %vm244 = vmand %vm211, %vm228
    %vm245 = vmand %vm212, %vm229
    %vm246 = vmand %vm213, %vm230
    %vm247 = vmand %vm214, %vm231
    %vm248 = vmand %vm215, %vm232
    %vm249 = vmand %vm216, %vm233
    %v250 = vsel %vm234, 1.0, 0.0
    %v251 = vsel %vm235, 1.0, 0.0
    %v252 = vsel %vm236, 1.0, 0.0
    %v253 = vsel %vm237, 1.0, 0.0
    %v254 = vsel %vm238, 1.0, 0.0
    %v255 = vsel %vm239, 1.0, 0.0
    %v256 = vsel %vm240, 1.0, 0.0
    %v257 = vsel %vm241, 1.0, 0.0
    %v258 = vsel %vm242, 1.0, 0.0
    %v259 = vsel %vm243, 1.0, 0.0
    %v260 = vsel %vm244, 1.0, 0.0
    %v261 = vsel %vm245, 1.0, 0.0
    %v262 = vsel %vm246, 1.0, 0.0
    %v263 = vsel %vm247, 1.0, 0.0
    %v264 = vsel %vm248, 1.0, 0.0
    %v265 = vsel %vm249, 1.0, 0.0
    %266 = vmatprep.subr.mxu0 0.0
    %267 = vmatpush1.msra.mxu0 %v250
    %268 = vmatprep.subr.mxu0 0.0
    %269 = vmatpush1.msra.mxu0 %v251
    %270 = vmatprep.subr.mxu0 0.0
    %271 = vmatpush1.msra.mxu0 %v252
    %272 = vmatprep.subr.mxu0 0.0
    %273 = vmatpush1.msra.mxu0 %v253
    %274 = vmatprep.subr.mxu0 0.0
    %275 = vmatpush1.msra.mxu0 %v254
    %276 = vmatprep.subr.mxu0 0.0
    %277 = vmatpush1.msra.mxu0 %v255
    %278 = vmatprep.subr.mxu0 0.0
    %279 = vmatpush1.msra.mxu0 %v256
    %280 = vmatprep.subr.mxu0 0.0
    %281 = vmatpush1.msra.mxu0 %v257
    %282 = vmatprep.subr.mxu0 0.0
    %283 = vmatpush1.msra.mxu0 %v258
    %284 = vmatprep.subr.mxu0 0.0
    %285 = vmatpush1.msra.mxu0 %v259
    %286 = vmatprep.subr.mxu0 0.0
    %287 = vmatpush1.msra.mxu0 %v260
    %288 = vmatprep.subr.mxu0 0.0
    %289 = vmatpush1.msra.mxu0 %v261
    %290 = vmatprep.subr.mxu0 0.0
    %291 = vmatpush1.msra.mxu0 %v262
    %292 = vmatprep.subr.mxu0 0.0
    %293 = vmatpush1.msra.mxu0 %v263
    %294 = vmatprep.subr.mxu0 0.0
    %295 = vmatpush1.msra.mxu0 %v264
    %296 = vmatprep.subr.mxu0 0.0
    %297 = vmatpush1.msra.mxu0 %v265
    %298 = vmatprep.subr.mxu0 0.0
    %299 = vmatpush1.msra.mxu0 0.0
    %300 = vmatprep.subr.mxu0 0.0
    %301 = vmatpush1.msra.mxu0 0.0
    %302 = vmatprep.subr.mxu0 0.0
    %303 = vmatpush1.msra.mxu0 0.0
    %304 = vmatprep.subr.mxu0 0.0
    %305 = vmatpush1.msra.mxu0 0.0
    %306 = vmatprep.subr.mxu0 0.0
    %307 = vmatpush1.msra.mxu0 0.0
    %308 = vmatprep.subr.mxu0 0.0
    %309 = vmatpush1.msra.mxu0 0.0
    %310 = vmatprep.subr.mxu0 0.0
    %311 = vmatpush1.msra.mxu0 0.0
    %312 = vmatprep.subr.mxu0 0.0
    %313 = vmatpush1.msra.mxu0 0.0
    %314 = vmatprep.subr.mxu0 0.0
    %315 = vmatpush1.msra.mxu0 0.0
    %316 = vmatprep.subr.mxu0 0.0
    %317 = vmatpush1.msra.mxu0 0.0
    %318 = vmatprep.subr.mxu0 0.0
    %319 = vmatpush1.msra.mxu0 0.0
    %320 = vmatprep.subr.mxu0 0.0
    %321 = vmatpush1.msra.mxu0 0.0
    %322 = vmatprep.subr.mxu0 0.0
    %323 = vmatpush1.msra.mxu0 0.0
    %324 = vmatprep.subr.mxu0 0.0
    %325 = vmatpush1.msra.mxu0 0.0
    %326 = vmatprep.subr.mxu0 0.0
    %327 = vmatpush1.msra.mxu0 0.0
    %328 = vmatprep.subr.mxu0 0.0
    %329 = vmatpush1.msra.mxu0 0.0
    %330 = vmatprep.mubr.f32.mxu0 0.0
    %331 = vmatmul.mubr.f32.gmra.mrb[0].mxu0 %v167
    %v332 = vpop.f32.mrb[0].mxu0
    %v333 = vadd.f32 0.0, %v332
    %v334 = vpop.f32.mrb[0].mxu0
    %335 = vmatprep.mubr.f32.mxu0 0.0
    %336 = vmatmul.mubr.f32.gmra.mrb[0].mxu0 %v172
    %v337 = vpop.f32.mrb[0].mxu0
    %v338 = vadd.f32 0.0, %v337
    %v339 = vpop.f32.mrb[0].mxu0
    %340 = vdwg.mxu0
    %v341 = vmul.f32 %v167, %v167
    %v342 = vmul.f32 %v172, %v172
    %343 = vmatprep.subr.mxu0 0.0
    %344 = vmatpush1.msra.mxu0 %v250
    %345 = vmatprep.subr.mxu0 0.0
    %346 = vmatpush1.msra.mxu0 %v251
    %347 = vmatprep.subr.mxu0 0.0
    %348 = vmatpush1.msra.mxu0 %v252
    %349 = vmatprep.subr.mxu0 0.0
    %350 = vmatpush1.msra.mxu0 %v253
    %351 = vmatprep.subr.mxu0 0.0
    %352 = vmatpush1.msra.mxu0 %v254
    %353 = vmatprep.subr.mxu0 0.0
    %354 = vmatpush1.msra.mxu0 %v255
    %355 = vmatprep.subr.mxu0 0.0
    %356 = vmatpush1.msra.mxu0 %v256
    %357 = vmatprep.subr.mxu0 0.0
    %358 = vmatpush1.msra.mxu0 %v257
    %359 = vmatprep.subr.mxu0 0.0
    %360 = vmatpush1.msra.mxu0 %v258
    %361 = vmatprep.subr.mxu0 0.0
    %362 = vmatpush1.msra.mxu0 %v259
    %363 = vmatprep.subr.mxu0 0.0
    %364 = vmatpush1.msra.mxu0 %v260
    %365 = vmatprep.subr.mxu0 0.0
    %366 = vmatpush1.msra.mxu0 %v261
    %367 = vmatprep.subr.mxu0 0.0
    %368 = vmatpush1.msra.mxu0 %v262
    %369 = vmatprep.subr.mxu0 0.0
    %370 = vmatpush1.msra.mxu0 %v263
    %371 = vmatprep.subr.mxu0 0.0
    %372 = vmatpush1.msra.mxu0 %v264
    %373 = vmatprep.subr.mxu0 0.0
    %374 = vmatpush1.msra.mxu0 %v265
    %375 = vmatprep.subr.mxu0 0.0
    %376 = vmatpush1.msra.mxu0 0.0
    %377 = vmatprep.subr.mxu0 0.0
    %378 = vmatpush1.msra.mxu0 0.0
    %379 = vmatprep.subr.mxu0 0.0
    %380 = vmatpush1.msra.mxu0 0.0
    %381 = vmatprep.subr.mxu0 0.0
    %382 = vmatpush1.msra.mxu0 0.0
    %383 = vmatprep.subr.mxu0 0.0
    %384 = vmatpush1.msra.mxu0 0.0
    %385 = vmatprep.subr.mxu0 0.0
    %386 = vmatpush1.msra.mxu0 0.0
    %387 = vmatprep.subr.mxu0 0.0
    %388 = vmatpush1.msra.mxu0 0.0
    %389 = vmatprep.subr.mxu0 0.0
    %390 = vmatpush1.msra.mxu0 0.0
    %391 = vmatprep.subr.mxu0 0.0
    %392 = vmatpush1.msra.mxu0 0.0
    %393 = vmatprep.subr.mxu0 0.0
    %394 = vmatpush1.msra.mxu0 0.0
    %395 = vmatprep.subr.mxu0 0.0
    %396 = vmatpush1.msra.mxu0 0.0
    %397 = vmatprep.subr.mxu0 0.0
    %398 = vmatpush1.msra.mxu0 0.0
    %399 = vmatprep.subr.mxu0 0.0
    %400 = vmatpush1.msra.mxu0 0.0
    %401 = vmatprep.subr.mxu0 0.0
    %402 = vmatpush1.msra.mxu0 0.0
    %403 = vmatprep.subr.mxu0 0.0
    %404 = vmatpush1.msra.mxu0 0.0
    %405 = vmatprep.subr.mxu0 0.0
    %406 = vmatpush1.msra.mxu0 0.0
    %407 = vmatprep.mubr.f32.mxu0 0.0
    %408 = vmatmul.mubr.f32.gmra.mrb[0].mxu0 %v341
    %v409 = vpop.f32.mrb[0].mxu0
    %v410 = vadd.f32 0.0, %v409
    %v411 = vpop.f32.mrb[0].mxu0
    %412 = vmatprep.mubr.f32.mxu0 0.0
    %413 = vmatmul.mubr.f32.gmra.mrb[0].mxu0 %v342
    %v414 = vpop.f32.mrb[0].mxu0
    %v415 = vadd.f32 0.0, %v414
    %v416 = vpop.f32.mrb[0].mxu0
    %417 = vdwg.mxu0
    %418 = vrot.lane.b32.xlu0 %v83, 103
    %v419 = vpop.permute.xlu0 %418
    %420 = vrot.lane.b32.xlu0 %v84, 103
    %v421 = vpop.permute.xlu0 %420
    %vm422 = vcmask 97280
    %v423 = vsel %vm422, %v419, 0
    %v425 = vsel %vm422, %v421, 0
    %vm427 = vcmask 1043456
    %v429 = vsel %vm427, %v338, 0
    %431 = vmatprep.subr.mxu0 0.0
    %432 = vmatpush1.msra.mxu0 %v333
    %433 = vmatprep.subr.mxu0 0.0
    %434 = vmatpush1.msra.mxu0 %v429
    %435 = vmatprep.subr.mxu0 0.0
    %436 = vmatpush1.msra.mxu0 0.0
    %437 = vmatprep.subr.mxu0 0.0
    %438 = vmatpush1.msra.mxu0 0.0
    %439 = vmatprep.subr.mxu0 0.0
    %440 = vmatpush1.msra.mxu0 0.0
    %441 = vmatprep.subr.mxu0 0.0
    %442 = vmatpush1.msra.mxu0 0.0
    %443 = vmatprep.subr.mxu0 0.0
    %444 = vmatpush1.msra.mxu0 0.0
    %445 = vmatprep.subr.mxu0 0.0
    %446 = vmatpush1.msra.mxu0 0.0
    %447 = vmatprep.subr.mxu0 0.0
    %448 = vmatpush1.msra.mxu0 0.0
    %449 = vmatprep.subr.mxu0 0.0
    %450 = vmatpush1.msra.mxu0 0.0
    %451 = vmatprep.subr.mxu0 0.0
    %452 = vmatpush1.msra.mxu0 0.0
    %453 = vmatprep.subr.mxu0 0.0
    %454 = vmatpush1.msra.mxu0 0.0
    %455 = vmatprep.subr.mxu0 0.0
    %456 = vmatpush1.msra.mxu0 0.0
    %457 = vmatprep.subr.mxu0 0.0
    %458 = vmatpush1.msra.mxu0 0.0
    %459 = vmatprep.subr.mxu0 0.0
    %460 = vmatpush1.msra.mxu0 0.0
    %461 = vmatprep.subr.mxu0 0.0
    %462 = vmatpush1.msra.mxu0 0.0
    %463 = vmatprep.subr.mxu0 0.0
    %464 = vmatpush1.msra.mxu0 0.0
    %465 = vmatprep.subr.mxu0 0.0
    %466 = vmatpush1.msra.mxu0 0.0
    %467 = vmatprep.subr.mxu0 0.0
    %468 = vmatpush1.msra.mxu0 0.0
    %469 = vmatprep.subr.mxu0 0.0
    %470 = vmatpush1.msra.mxu0 0.0
    %471 = vmatprep.subr.mxu0 0.0
    %472 = vmatpush1.msra.mxu0 0.0
    %473 = vmatprep.subr.mxu0 0.0
    %474 = vmatpush1.msra.mxu0 0.0
    %475 = vmatprep.subr.mxu0 0.0
    %476 = vmatpush1.msra.mxu0 0.0
    %477 = vmatprep.subr.mxu0 0.0
    %478 = vmatpush1.msra.mxu0 0.0
    %479 = vmatprep.subr.mxu0 0.0
    %480 = vmatpush1.msra.mxu0 0.0
    %481 = vmatprep.subr.mxu0 0.0
    %482 = vmatpush1.msra.mxu0 0.0
    %483 = vmatprep.subr.mxu0 0.0
    %484 = vmatpush1.msra.mxu0 0.0
    %485 = vmatprep.subr.mxu0 0.0
    %486 = vmatpush1.msra.mxu0 0.0
    %487 = vmatprep.subr.mxu0 0.0
    %488 = vmatpush1.msra.mxu0 0.0
    %489 = vmatprep.subr.mxu0 0.0
    %490 = vmatpush1.msra.mxu0 0.0
    %491 = vmatprep.subr.mxu0 0.0
    %492 = vmatpush1.msra.mxu0 0.0
    %493 = vmatprep.subr.mxu0 0.0
    %494 = vmatpush1.msra.mxu0 0.0
    %495 = vmatprep.mubr.f32.mxu0 0.0
    %496 = vmatmul.mubr.f32.gmra.mrb[0].mxu0 %v423
    %v497 = vpop.f32.mrb[0].mxu0
    %v498 = vadd.f32 0.0, %v497
    %v499 = vpop.f32.mrb[0].mxu0
    %500 = vmatprep.mubr.f32.mxu0 0.0
    %501 = vmatmul.mubr.f32.gmra.mrb[0].mxu0 %v425
    %v502 = vpop.f32.mrb[0].mxu0
    %v503 = vadd.f32 0.0, %v502
    %v504 = vpop.f32.mrb[0].mxu0
    %505 = vdwg.mxu0
    %v507 = vsel %vm427, %v415, 0
    %509 = vmatprep.subr.mxu0 0.0
    %510 = vmatpush1.msra.mxu0 %v410
    %511 = vmatprep.subr.mxu0 0.0
    %512 = vmatpush1.msra.mxu0 %v507
    %513 = vmatprep.subr.mxu0 0.0
    %514 = vmatpush1.msra.mxu0 0.0
    %515 = vmatprep.subr.mxu0 0.0
    %516 = vmatpush1.msra.mxu0 0.0
    %517 = vmatprep.subr.mxu0 0.0
    %518 = vmatpush1.msra.mxu0 0.0
    %519 = vmatprep.subr.mxu0 0.0
    %520 = vmatpush1.msra.mxu0 0.0
    %521 = vmatprep.subr.mxu0 0.0
    %522 = vmatpush1.msra.mxu0 0.0
    %523 = vmatprep.subr.mxu0 0.0
    %524 = vmatpush1.msra.mxu0 0.0
    %525 = vmatprep.subr.mxu0 0.0
    %526 = vmatpush1.msra.mxu0 0.0
    %527 = vmatprep.subr.mxu0 0.0
    %528 = vmatpush1.msra.mxu0 0.0
    %529 = vmatprep.subr.mxu0 0.0
    %530 = vmatpush1.msra.mxu0 0.0
    %531 = vmatprep.subr.mxu0 0.0
    %532 = vmatpush1.msra.mxu0 0.0
    %533 = vmatprep.subr.mxu0 0.0
    %534 = vmatpush1.msra.mxu0 0.0
    %535 = vmatprep.subr.mxu0 0.0
    %536 = vmatpush1.msra.mxu0 0.0
    %537 = vmatprep.subr.mxu0 0.0
    %538 = vmatpush1.msra.mxu0 0.0
    %539 = vmatprep.subr.mxu0 0.0
    %540 = vmatpush1.msra.mxu0 0.0
    %541 = vmatprep.subr.mxu0 0.0
    %542 = vmatpush1.msra.mxu0 0.0
    %543 = vmatprep.subr.mxu0 0.0
    %544 = vmatpush1.msra.mxu0 0.0
    %545 = vmatprep.subr.mxu0 0.0
    %546 = vmatpush1.msra.mxu0 0.0
    %547 = vmatprep.subr.mxu0 0.0
    %548 = vmatpush1.msra.mxu0 0.0
    %549 = vmatprep.subr.mxu0 0.0
    %550 = vmatpush1.msra.mxu0 0.0
    %551 = vmatprep.subr.mxu0 0.0
    %552 = vmatpush1.msra.mxu0 0.0
    %553 = vmatprep.subr.mxu0 0.0
    %554 = vmatpush1.msra.mxu0 0.0
    %555 = vmatprep.subr.mxu0 0.0
    %556 = vmatpush1.msra.mxu0 0.0
    %557 = vmatprep.subr.mxu0 0.0
    %558 = vmatpush1.msra.mxu0 0.0
    %559 = vmatprep.subr.mxu0 0.0
    %560 = vmatpush1.msra.mxu0 0.0
    %561 = vmatprep.subr.mxu0 0.0
    %562 = vmatpush1.msra.mxu0 0.0
    %563 = vmatprep.subr.mxu0 0.0
    %564 = vmatpush1.msra.mxu0 0.0
    %565 = vmatprep.subr.mxu0 0.0
    %566 = vmatpush1.msra.mxu0 0.0
    %567 = vmatprep.subr.mxu0 0.0
    %568 = vmatpush1.msra.mxu0 0.0
    %569 = vmatprep.subr.mxu0 0.0
    %570 = vmatpush1.msra.mxu0 0.0
    %571 = vmatprep.subr.mxu0 0.0
    %572 = vmatpush1.msra.mxu0 0.0
    %573 = vmatprep.mubr.f32.mxu0 0.0
    %574 = vmatmul.mubr.f32.gmra.mrb[0].mxu0 %v423
    %v575 = vpop.f32.mrb[0].mxu0
    %v576 = vadd.f32 0.0, %v575
    %v577 = vpop.f32.mrb[0].mxu0
    %578 = vmatprep.mubr.f32.mxu0 0.0
    %579 = vmatmul.mubr.f32.gmra.mrb[0].mxu0 %v425
    %v580 = vpop.f32.mrb[0].mxu0
    %v581 = vadd.f32 0.0, %v580
    %v582 = vpop.f32.mrb[0].mxu0
    %583 = vdwg.mxu0
    %v584 = vmul.f32 %v498, 0.03125
    %v585 = vmul.f32 %v503, 0.03125
    %v586 = vmul.f32 %v576, 0.03125
    %v587 = vmul.f32 %v581, 0.03125
    %v588 = vmul.f32 %v584, %v584
    %v589 = vmul.f32 %v585, %v585
    %v590 = vsub.f32 %v586, %v588
    %v591 = vsub.f32 %v587, %v589
    %v592 = vmax.f32 %v590, 0.0
    %v593 = vmax.f32 %v591, 0.0
    %v594 = vadd.f32 %v592, 1e-05
    %v595 = vadd.f32 %v593, 1e-05
    %v596 = vrsqrt.pop %v594
    %v597 = vrsqrt.pop %v595
    %598 = vset.pattern.permute.xlu0 37
    %599 = vperm.xlu0 %598, %v83
    %v600 = vpop.permute.xlu0 %599
    %602 = vset.pattern.permute.xlu0 37
    %603 = vperm.xlu0 %602, %v84
    %v604 = vpop.permute.xlu0 %603
    %v606 = vmul.f32 %v600, %v596
    %v607 = vmul.f32 %v604, %v597
    %v608 = vmul.f32 %v584, %v606
    %v609 = vmul.f32 %v585, %v607
    %610 = vset.pattern.permute.xlu0 38
    %611 = vperm.xlu0 %610, %v83
    %v612 = vpop.permute.xlu0 %611
    %614 = vset.pattern.permute.xlu0 38
    %615 = vperm.xlu0 %614, %v84
    %v616 = vpop.permute.xlu0 %615
    %v618 = vsub.f32 %v612, %v608
    %v619 = vsub.f32 %v616, %v609
    %vm620 = vcmask 15360
    %v622 = vsel %vm620, %v606, 0
    %v625 = vsel %vm620, %v607, 0
    %vm627 = vcmask 1041408
    %v629 = vsel %vm627, %v184, 0
    %631 = vmatprep.subr.mxu0 0.0
    %632 = vmatpush1.msra.mxu0 %v629
    %633 = vmatprep.subr.mxu0 0.0
    %634 = vmatpush1.msra.mxu0 0.0
    %635 = vmatprep.subr.mxu0 0.0
    %636 = vmatpush1.msra.mxu0 0.0
    %637 = vmatprep.subr.mxu0 0.0
    %638 = vmatpush1.msra.mxu0 0.0
    %639 = vmatprep.subr.mxu0 0.0
    %640 = vmatpush1.msra.mxu0 0.0
    %641 = vmatprep.subr.mxu0 0.0
    %642 = vmatpush1.msra.mxu0 0.0
    %643 = vmatprep.subr.mxu0 0.0
    %644 = vmatpush1.msra.mxu0 0.0
    %645 = vmatprep.subr.mxu0 0.0
    %646 = vmatpush1.msra.mxu0 0.0
    %647 = vmatprep.subr.mxu0 0.0
    %648 = vmatpush1.msra.mxu0 0.0
    %649 = vmatprep.subr.mxu0 0.0
    %650 = vmatpush1.msra.mxu0 0.0
    %651 = vmatprep.subr.mxu0 0.0
    %652 = vmatpush1.msra.mxu0 0.0
    %653 = vmatprep.subr.mxu0 0.0
    %654 = vmatpush1.msra.mxu0 0.0
    %655 = vmatprep.subr.mxu0 0.0
    %656 = vmatpush1.msra.mxu0 0.0
    %657 = vmatprep.subr.mxu0 0.0
    %658 = vmatpush1.msra.mxu0 0.0
    %659 = vmatprep.subr.mxu0 0.0
    %660 = vmatpush1.msra.mxu0 0.0
    %661 = vmatprep.subr.mxu0 0.0
    %662 = vmatpush1.msra.mxu0 0.0
    %663 = vmatprep.subr.mxu0 0.0
    %664 = vmatpush1.msra.mxu0 0.0
    %665 = vmatprep.subr.mxu0 0.0
    %666 = vmatpush1.msra.mxu0 0.0
    %667 = vmatprep.subr.mxu0 0.0
    %668 = vmatpush1.msra.mxu0 0.0
    %669 = vmatprep.subr.mxu0 0.0
    %670 = vmatpush1.msra.mxu0 0.0
    %671 = vmatprep.subr.mxu0 0.0
    %672 = vmatpush1.msra.mxu0 0.0
    %673 = vmatprep.subr.mxu0 0.0
    %674 = vmatpush1.msra.mxu0 0.0
    %675 = vmatprep.subr.mxu0 0.0
    %676 = vmatpush1.msra.mxu0 0.0
    %677 = vmatprep.subr.mxu0 0.0
    %678 = vmatpush1.msra.mxu0 0.0
    %679 = vmatprep.subr.mxu0 0.0
    %680 = vmatpush1.msra.mxu0 0.0
    %681 = vmatprep.subr.mxu0 0.0
    %682 = vmatpush1.msra.mxu0 0.0
    %683 = vmatprep.subr.mxu0 0.0
    %684 = vmatpush1.msra.mxu0 0.0
    %685 = vmatprep.subr.mxu0 0.0
    %686 = vmatpush1.msra.mxu0 0.0
    %687 = vmatprep.subr.mxu0 0.0
    %688 = vmatpush1.msra.mxu0 0.0
    %689 = vmatprep.subr.mxu0 0.0
    %690 = vmatpush1.msra.mxu0 0.0
    %691 = vmatprep.subr.mxu0 0.0
    %692 = vmatpush1.msra.mxu0 0.0
    %693 = vmatprep.subr.mxu0 0.0
    %694 = vmatpush1.msra.mxu0 0.0
    %695 = vmatprep.mubr.f32.mxu0 0.0
    %696 = vmatmul.mubr.f32.gmra.mrb[0].mxu0 %v622
    %v697 = vpop.f32.mrb[0].mxu0
    %v698 = vadd.f32 0.0, %v697
    %v699 = vpop.f32.mrb[0].mxu0
    %700 = vmatprep.mubr.f32.mxu0 0.0
    %701 = vmatmul.mubr.f32.gmra.mrb[0].mxu0 %v625
    %v702 = vpop.f32.mrb[0].mxu0
    %v703 = vadd.f32 0.0, %v702
    %v704 = vpop.f32.mrb[0].mxu0
    %705 = vdwg.mxu0
    %v707 = vsel %vm620, %v618, 0
    %v710 = vsel %vm620, %v619, 0
    %712 = vmatprep.subr.mxu0 0.0
    %713 = vmatpush1.msra.mxu0 %v629
    %714 = vmatprep.subr.mxu0 0.0
    %715 = vmatpush1.msra.mxu0 0.0
    %716 = vmatprep.subr.mxu0 0.0
    %717 = vmatpush1.msra.mxu0 0.0
    %718 = vmatprep.subr.mxu0 0.0
    %719 = vmatpush1.msra.mxu0 0.0
    %720 = vmatprep.subr.mxu0 0.0
    %721 = vmatpush1.msra.mxu0 0.0
    %722 = vmatprep.subr.mxu0 0.0
    %723 = vmatpush1.msra.mxu0 0.0
    %724 = vmatprep.subr.mxu0 0.0
    %725 = vmatpush1.msra.mxu0 0.0
    %726 = vmatprep.subr.mxu0 0.0
    %727 = vmatpush1.msra.mxu0 0.0
    %728 = vmatprep.subr.mxu0 0.0
    %729 = vmatpush1.msra.mxu0 0.0
    %730 = vmatprep.subr.mxu0 0.0
    %731 = vmatpush1.msra.mxu0 0.0
    %732 = vmatprep.subr.mxu0 0.0
    %733 = vmatpush1.msra.mxu0 0.0
    %734 = vmatprep.subr.mxu0 0.0
    %735 = vmatpush1.msra.mxu0 0.0
    %736 = vmatprep.subr.mxu0 0.0
    %737 = vmatpush1.msra.mxu0 0.0
    %738 = vmatprep.subr.mxu0 0.0
    %739 = vmatpush1.msra.mxu0 0.0
    %740 = vmatprep.subr.mxu0 0.0
    %741 = vmatpush1.msra.mxu0 0.0
    %742 = vmatprep.subr.mxu0 0.0
    %743 = vmatpush1.msra.mxu0 0.0
    %744 = vmatprep.subr.mxu0 0.0
    %745 = vmatpush1.msra.mxu0 0.0
    %746 = vmatprep.subr.mxu0 0.0
    %747 = vmatpush1.msra.mxu0 0.0
    %748 = vmatprep.subr.mxu0 0.0
    %749 = vmatpush1.msra.mxu0 0.0
    %750 = vmatprep.subr.mxu0 0.0
    %751 = vmatpush1.msra.mxu0 0.0
    %752 = vmatprep.subr.mxu0 0.0
    %753 = vmatpush1.msra.mxu0 0.0
    %754 = vmatprep.subr.mxu0 0.0
    %755 = vmatpush1.msra.mxu0 0.0
    %756 = vmatprep.subr.mxu0 0.0
    %757 = vmatpush1.msra.mxu0 0.0
    %758 = vmatprep.subr.mxu0 0.0
    %759 = vmatpush1.msra.mxu0 0.0
    %760 = vmatprep.subr.mxu0 0.0
    %761 = vmatpush1.msra.mxu0 0.0
    %762 = vmatprep.subr.mxu0 0.0
    %763 = vmatpush1.msra.mxu0 0.0
    %764 = vmatprep.subr.mxu0 0.0
    %765 = vmatpush1.msra.mxu0 0.0
    %766 = vmatprep.subr.mxu0 0.0
    %767 = vmatpush1.msra.mxu0 0.0
    %768 = vmatprep.subr.mxu0 0.0
    %769 = vmatpush1.msra.mxu0 0.0
    %770 = vmatprep.subr.mxu0 0.0
    %771 = vmatpush1.msra.mxu0 0.0
    %772 = vmatprep.subr.mxu0 0.0
    %773 = vmatpush1.msra.mxu0 0.0
    %774 = vmatprep.subr.mxu0 0.0
    %775 = vmatpush1.msra.mxu0 0.0
    %776 = vmatprep.mubr.f32.mxu0 0.0
    %777 = vmatmul.mubr.f32.gmra.mrb[0].mxu0 %v707
    %v778 = vpop.f32.mrb[0].mxu0
    %v779 = vadd.f32 0.0, %v778
    %v780 = vpop.f32.mrb[0].mxu0
    %781 = vmatprep.mubr.f32.mxu0 0.0
    %782 = vmatmul.mubr.f32.gmra.mrb[0].mxu0 %v710
    %v783 = vpop.f32.mrb[0].mxu0
    %v784 = vadd.f32 0.0, %v783
    %v785 = vpop.f32.mrb[0].mxu0
    %786 = vdwg.mxu0
    %v787 = vmul.f32 %v167, %v698
    %v788 = vmul.f32 %v172, %v703
    %v789 = vadd.f32 %v787, %v779
    %v790 = vadd.f32 %v788, %v784
    %v791 = vmax.f32 %v789, 0.0
    %v792 = vmax.f32 %v790, 0.0
    %793 = vst [vmem:[%s2] sm:$0xff] %v791
    %794 = vst [vmem:[%s2 + $0x8] sm:$0xf] %v792
    // Predicated region
    $region18: #{apply.1} parent=1 // pred_check
      _
    $region19: #{apply.1} parent=1 // pred_check_branch
      %796 = sbr.rel (0) target = $region21
    $region20: #{apply.1} parent=1 // pred_region
      _
    $region21: #{apply.1} parent=1 // pred_fallthru
      _
    // Predicated region
    $region22: #{apply.1} parent=1 // pred_check
      _
    $region23: #{apply.1} parent=1 // pred_check_branch
      %798 = sbr.rel (0) target = $region25
    $region24: #{apply.1} parent=1 // pred_region
      _
    $region25: #{apply.1} parent=1 // pred_fallthru
      _
    %799 = vsyncpa [#allocation4], 1
    %800 = vsyncpa [#allocation6], 1

</llo_original>
